<compile_context>
chip_gen: v7x
topology: tpu7x:2x2x1
jax: 0.10.0
libtpu: 0.0.40
codegen_flags: <defaults>
</compile_context>

<pallas_src>
import math

import jax
import jax.numpy as jnp
from jax.experimental import pallas as pl
from jax.experimental.pallas import tpu as pltpu


_LANES = 128      # lane width of a TPU vreg (fast axis)
_SUBLANES = 8     # sublanes per vreg for a 32-bit dtype

# Per-generation pipeline-buffer size.  Default double buffering of input +
# output means ~4x this much VMEM is live, which must stay under each
# generation's scoped-VMEM budget (v5e 16 MiB default, v6e 32 MiB default,
# v7x 32 MiB default of 64 MiB physical).
_BLOCK_BYTES_BY_GEN = {
    "v5": 2 * 1024 * 1024,   # 4 x 2 MiB =  8 MiB  < 16 MiB scoped default
    "v6": 4 * 1024 * 1024,   # 4 x 4 MiB = 16 MiB  < 32 MiB scoped default
    "v7": 8 * 1024 * 1024,   # 4 x 8 MiB = 32 MiB  -> needs explicit limit
}
_DEFAULT_BLOCK_BYTES = 2 * 1024 * 1024
# Scoped-VMEM override used only when the 8 MiB v7x block is selected
# (32 MiB of buffers + headroom, still well inside 64 MiB physical).
_V7_VMEM_LIMIT_BYTES = 48 * 1024 * 1024


def _identity_kernel(x_ref, o_ref):
    # BaseModel.forward is abstract: the only defined semantics is a
    # pass-through.  A concrete subclass's real compute replaces this line.
    o_ref[...] = x_ref[...]


def _chip_generation() -> str:
    """Coarse TPU generation from device_kind; 'unknown' if undetectable."""
    try:
        kind = jax.devices()[0].device_kind.lower()
    except Exception:
        return "unknown"
    if "v7" in kind or "7x" in kind:
        return "v7"
    if "v6" in kind:
        return "v6"
    if "v5" in kind:
        return "v5"
    return "unknown"


def _choose_block_rows(rows: int, itemsize: int, gen: str) -> int:
    # Dtype-aware sublane alignment: sub-32-bit dtypes pack along sublanes,
    # so the native VMEM tile is (8 * packing, 128) — 8 rows for f32, 16 for
    # bf16, 32 for int8/fp8.  Keeping block_rows on that boundary avoids
    # masked stores / layout repacking on the ragged last block.
    packing = max(1, 4 // itemsize)
    align = _SUBLANES * packing
    block_bytes = _BLOCK_BYTES_BY_GEN.get(gen, _DEFAULT_BLOCK_BYTES)
    max_block_rows = max(align, (block_bytes // (_LANES * itemsize)) // align * align)

    if rows > max_block_rows:
        # cdiv grid; Pallas masks the ragged final block, so the tile stays
        # at full size for every row count.
        return max_block_rows
    if gen == "v7" and rows >= 2 * align:
        # Whole array fits one block, but a 1-step grid would leave one of
        # v7x's two TensorCores idle; split into >= 2 aligned steps so
        # dimension_semantics=("parallel",) engages both.
        half = -(-rows // 2)
        return -(-half // align) * align
    # Single-TC v5e/v6e (or tiny arrays): fewest grid steps is best.  A block
    # equal to the full array also waives the (8,128) divisibility rule.
    return rows


def _copy_2d(x2d: jax.Array, block_rows: int, gen: str) -> jax.Array:
    rows, cols = x2d.shape
    itemsize = jnp.dtype(x2d.dtype).itemsize
    vmem_limit = _V7_VMEM_LIMIT_BYTES if gen == "v7" else None
    return pl.pallas_call(
        _identity_kernel,
        out_shape=jax.ShapeDtypeStruct((rows, cols), x2d.dtype),
        grid_spec=pltpu.PrefetchScalarGridSpec(
            num_scalar_prefetch=0,
            grid=(pl.cdiv(rows, block_rows),),
            in_specs=[pl.BlockSpec((block_rows, cols), lambda i: (i, 0))],
            out_specs=pl.BlockSpec((block_rows, cols), lambda i: (i, 0)),
        ),
        # Identity pass-through: alias the input buffer with the output so
        # XLA can skip a separate HBM output allocation (fully elided only
        # if the caller also donates the input at the jit boundary;
        # otherwise XLA inserts a protective copy and correctness holds).
        input_output_aliases={0: 0},
        # Pure memory traffic (zero FLOPs): lets XLA's scheduler overlap this
        # call with surrounding ops.
        cost_estimate=pl.CostEstimate(
            flops=0,
            transcendentals=0,
            bytes_accessed=2 * rows * cols * itemsize,
        ),
        compiler_params=pltpu.CompilerParams(
            # Grid axis shards across v7x's 2 TensorCores; it is a plain
            # sequential loop (no cost) on single-TC v5e/v6e.
            dimension_semantics=("parallel",),
            vmem_limit_bytes=vmem_limit,
        ),
    )(x2d)


def base_model_forward(x: jax.Array) -> jax.Array:
    """Pass-through forward of the abstract BaseModel as a Pallas kernel."""
    orig_shape = x.shape
    n = math.prod(orig_shape) if orig_shape else 1
    if n == 0:
        # Zero-sized input: nothing to copy (avoid a 0-step grid).
        return x

    gen = _chip_generation()
    itemsize = jnp.dtype(x.dtype).itemsize
    bulk = (n // _LANES) * _LANES   # lane-dense prefix
    tail = n - bulk                 # < 128-element ragged remainder

    if tail == 0:
        # Common case: element count divisible by 128 -> lane-dense
        # (rows, 128) view.  Plain reshape, no padding or wrapper copies.
        rows = n // _LANES
        out2d = _copy_2d(
            x.reshape(rows, _LANES), _choose_block_rows(rows, itemsize, gen), gen
        )
        return out2d.reshape(orig_shape)

    if bulk == 0:
        # Fewer than 128 elements total: one tiny whole-array (1, n) block
        # (block == full array waives the (8,128) rule).
        return _copy_2d(x.reshape(1, n), 1, gen).reshape(orig_shape)

    # Ragged element count: push the lane-dense bulk through the tiled path
    # (full HBM-roofline layout, bounded VMEM) and handle only the
    # <128-element tail as a tiny separate block, instead of a single (1, n)
    # whole-array block that wastes 8x VMEM on sublane padding and can OOM
    # for large inputs.
    flat = x.reshape(n)
    rows = bulk // _LANES
    bulk_out = _copy_2d(
        flat[:bulk].reshape(rows, _LANES),
        _choose_block_rows(rows, itemsize, gen),
        gen,
    ).reshape(bulk)
    tail_out = _copy_2d(flat[bulk:].reshape(1, tail), 1, gen).reshape(tail)
    return jnp.concatenate([bulk_out, tail_out]).reshape(orig_shape)


if __name__ == "__main__":
    key = jax.random.PRNGKey(0)
    # NCHW input consistent with the (abstract) module: batch=2, channels=4, 16x16.
    x = jax.random.normal(key, (2, 4, 16, 16), dtype=jnp.float32)

    y = base_model_forward(x)
    jax.block_until_ready(y)

    # Identity semantics check (BaseModel has no parameters / no transform).
    assert y.shape == x.shape and y.dtype == x.dtype
    assert bool(jnp.allclose(y, x))

    # Exercise the ragged (n % 128 != 0) bulk + tail fallback path as well.
    x_ragged = jax.random.normal(jax.random.PRNGKey(0), (3, 43), dtype=jnp.float32)
    y_ragged = base_model_forward(x_ragged)
    jax.block_until_ready(y_ragged)
    assert y_ragged.shape == x_ragged.shape and y_ragged.dtype == x_ragged.dtype
    assert bool(jnp.allclose(y_ragged, x_ragged))

    print("KERNEL_OK")
</pallas_src>

<mosaic_0001>
module attributes {stable_mosaic.version = 11 : i64} {
  func.func @_identity_kernel(%arg0: i32, %arg1: memref<16x128xf32, #tpu.memory_space<vmem>>, %arg2: memref<16x128xf32, #tpu.memory_space<vmem>>) attributes {dimension_semantics = [#tpu.dimension_semantics<parallel>], iteration_bounds = array<i64: 1>, scalar_prefetch = 0 : i64, scratch_operands = 0 : i64, tpu.core_type = #tpu.core_type<tc>, window_params = [{transform_indices = @transform_0, window_bounds = array<i64: 16, 128>}, {transform_indices = @transform_1, window_bounds = array<i64: 16, 128>}]} {
    %c0 = arith.constant 0 : index
    %c0_0 = arith.constant 0 : index
    %0 = vector.load %arg1[%c0, %c0_0] : memref<16x128xf32, #tpu.memory_space<vmem>>, vector<16x128xf32>
    %c0_1 = arith.constant 0 : index
    %c0_2 = arith.constant 0 : index
    %1 = vector.load %arg2[%c0_1, %c0_2] : memref<16x128xf32, #tpu.memory_space<vmem>>, vector<16x128xf32>
    tpu.vector_store %arg2[%c0_1, %c0_2], %0 {strides = array<i32>} : memref<16x128xf32, #tpu.memory_space<vmem>>, vector<16x128xf32>,
    return
  }
  func.func @transform_0(%arg0: i32) -> (i32, i32) {
    %c0_i32 = arith.constant 0 : i32
    %c0_i32_0 = arith.constant 0 : i32
    return %arg0, %c0_i32 : i32, i32
  }
  func.func @transform_1(%arg0: i32) -> (i32, i32) {
    %c0_i32 = arith.constant 0 : i32
    %c0_i32_0 = arith.constant 0 : i32
    return %arg0, %c0_i32 : i32, i32
  }
}

</mosaic_0001>

<llo_original>
// kernel: tpu_custom_call.1
$region0: #{tpu_custom_call.1}
  #allocation0 [shape = 'u32[]', space=smem, size = 0x4, offset = 0x4, fixed_abs, tag = 'smem constant byte address 0x4 - core index']
  #allocation1 [shape = 'u32[144,128]{1,0:T(1,128)}', space=vmem, size = 0x12000, scoped, tag = 'internal scratch']
  %s0 = inlined_call_operand.hbm [shape: f32[16,128], index: 0, kind: input, shape index: {}, may-alias: {0,1}]
  %s1 = inlined_call_operand.hbm [shape: f32[16,128], index: 1, kind: output, shape index: {}, may-alias: {0,1}]
  %s2 = sld [smem:[#allocation0]]
  $region18: #{tpu_custom_call.1} parent=0
    _
  %s4 = ssub.s32 1, %s2
  %s5 = scalar_select 0, %s4, %s2
  $region1: #{tpu_custom_call.1} parent=0
    #allocation2 [shape = 'u8[8192]{0}', space=vmem, size = 0x2000, scoped, tag = 'input window, operand 0, single buffered']
    #allocation3 [shape = 's32[1]{0}', space=sflag, size = 0x4, scoped, tag = 'scoped memory for tpu_custom_call.1']
    #allocation4 [shape = 's32[1]{0}', space=sflag, size = 0x4, scoped, tag = 'scoped memory for tpu_custom_call.1']
    #allocation5 [shape = 'u8[8192]{0}', space=vmem, size = 0x2000, scoped, tag = 'output window, operand 0, single buffered']
    %6 = vsyncpa [#allocation3], 0
    %7 = vsyncpa [#allocation4], 0
    // Predicated region
    $region2: #{tpu_custom_call.1} parent=1 // pred_check
      _
    $region3: #{tpu_custom_call.1} parent=1 // pred_check_branch
      %9 = sbr.rel (0) target = $region5
    $region4: #{tpu_custom_call.1} parent=1 // pred_region
      %s11 = ssub.s32 256, 256
      %12 = vsyncadd [#allocation3], %s11
      %s13 = sshll.u32 [#allocation2], 4
      %s14 = int_to_ptr.vmem [resolvable:$true] %s13
      %19 = dma.hbm_to_vmem [thread:$0]  %s0, 256, %s14, [#allocation3], 128, 128, 8
    $region5: #{tpu_custom_call.1} parent=1 // pred_fallthru
      _
    // Predicated region
    $region6: #{tpu_custom_call.1} parent=1 // pred_check
      _
    $region7: #{tpu_custom_call.1} parent=1 // pred_check_branch
      %21 = sbr.rel (0) target = $region9
    $region8: #{tpu_custom_call.1} parent=1 // pred_region
      %22 = dma.done [#allocation3], 256
    $region9: #{tpu_custom_call.1} parent=1 // pred_fallthru
      _
    %v23 = vld [vmem:[#allocation2] sm:$0xff]
    %v24 = vld [vmem:[#allocation2 + $0x8] sm:$0xff]
    %25 = vst [vmem:[#allocation5] sm:$0xff] %v23
    %26 = vst [vmem:[#allocation5 + $0x8] sm:$0xff] %v24
    // Predicated region
    $region10: #{tpu_custom_call.1} parent=1 // pred_check
      _
    $region11: #{tpu_custom_call.1} parent=1 // pred_check_branch
      %28 = sbr.rel (0) target = $region13
    $region12: #{tpu_custom_call.1} parent=1 // pred_region
      %s30 = ssub.s32 256, 256
      %31 = vsyncadd [#allocation4], %s30
      %s32 = sshll.u32 [#allocation5], 4
      %s33 = int_to_ptr.vmem [resolvable:$true] %s32
      %38 = dma.vmem_to_hbm [thread:$0]  %s33, 256, %s1, [#allocation4], 128, 128, 8
    $region13: #{tpu_custom_call.1} parent=1 // pred_fallthru
      _
    // Predicated region
    $region14: #{tpu_custom_call.1} parent=1 // pred_check
      _
    $region15: #{tpu_custom_call.1} parent=1 // pred_check_branch
      %40 = sbr.rel (0) target = $region17
    $region16: #{tpu_custom_call.1} parent=1 // pred_region
      %41 = dma.done [#allocation4], 256
    $region17: #{tpu_custom_call.1} parent=1 // pred_fallthru
      _
    %42 = vsyncpa [#allocation3], 1
    %43 = vsyncpa [#allocation4], 1

</llo_original>
